<compile_context>
chip_gen: v6e
topology: v6e:2x2x1
jax: 0.10.0
libtpu: 0.0.40
codegen_flags: <defaults>
</compile_context>

<pallas_src>
import jax
import jax.numpy as jnp
from jax.experimental import pallas as pl
from jax.experimental.pallas import tpu as pltpu

INPUT_SIZE = 761          # QNetwork.input_size
HIDDEN_SIZE = 256
OUTPUT_SIZE = 26

# lane-aligned padded sizes (multiples of 128); padded rows/cols are zero.
IN_PAD = 768              # 761 -> 768
OUT_PAD = 128             # 26  -> 128

MAX_TB = 1024             # batch-tile cap (v5e-friendly; ~5 MiB VMEM at 1024)
SUBLANE = 16              # bf16 sublane tile


def _round_up(x, m):
    return ((x + m - 1) // m) * m


def _cdiv(a, b):
    return -(-a // b)


def _pick_tb(b_pad):
    """Batch tile: >=2 tiles when the batch allows it (v7x megacore), capped at
    MAX_TB, always a multiple of the bf16 sublane (16)."""
    half = _round_up(_cdiv(b_pad, 2), SUBLANE)
    return max(SUBLANE, min(MAX_TB, half))


def _qnet_kernel(x_ref, w1_ref, b1_ref, w2_ref, b2_ref, w3_ref, b3_ref, o_ref):
    """Fused MLP on one (TB, IN_PAD) batch tile, all operands VMEM-resident."""
    x = x_ref[...]                                                    # bf16 (TB, IN_PAD)
    h1 = jnp.dot(x, w1_ref[...], preferred_element_type=jnp.float32) + b1_ref[...]
    h1 = jnp.maximum(h1, 0.0).astype(jnp.bfloat16)
    h2 = jnp.dot(h1, w2_ref[...], preferred_element_type=jnp.float32) + b2_ref[...]
    h2 = jnp.maximum(h2, 0.0).astype(jnp.bfloat16)
    o_ref[...] = (jnp.dot(h2, w3_ref[...], preferred_element_type=jnp.float32)
                  + b3_ref[...]).astype(o_ref.dtype)


@jax.jit
def _qnet_pallas(x_pad, w1, b1, w2, b2, w3, b3):
    """x_pad: (b_pad, IN_PAD) bf16 with b_pad a multiple of 16 (NOT of the tile)."""
    b_pad = x_pad.shape[0]
    tb = _pick_tb(b_pad)
    n_tiles = _cdiv(b_pad, tb)          # partial last tile: OOB writes are dropped

    # x / out tiles walk the batch axis; weights & biases stay pinned (block 0,0).
    x_spec = pl.BlockSpec((tb, IN_PAD), lambda i: (i, 0))
    o_spec = pl.BlockSpec((tb, OUT_PAD), lambda i: (i, 0))
    pin = lambda shape: pl.BlockSpec(shape, lambda i: (0, 0))

    flops = 2 * b_pad * (IN_PAD * HIDDEN_SIZE
                         + HIDDEN_SIZE * HIDDEN_SIZE
                         + HIDDEN_SIZE * OUT_PAD)
    bytes_accessed = (x_pad.size * 2                               # bf16 input
                      + (w1.size + w2.size + w3.size) * 2          # bf16 weights
                      + (b1.size + b2.size + b3.size) * 4          # f32 biases
                      + b_pad * OUT_PAD * 2)                       # bf16 output

    return pl.pallas_call(
        _qnet_kernel,
        out_shape=jax.ShapeDtypeStruct((b_pad, OUT_PAD), jnp.bfloat16),
        grid=(n_tiles,),
        in_specs=[
            x_spec,
            pin((IN_PAD, HIDDEN_SIZE)),
            pin((1, HIDDEN_SIZE)),
            pin((HIDDEN_SIZE, HIDDEN_SIZE)),
            pin((1, HIDDEN_SIZE)),
            pin((HIDDEN_SIZE, OUT_PAD)),
            pin((1, OUT_PAD)),
        ],
        out_specs=o_spec,
        compiler_params=pltpu.CompilerParams(
            dimension_semantics=("parallel",),
            vmem_limit_bytes=32 * 1024 * 1024,   # safe on v7x's 64 MiB VMEM
        ),
        cost_estimate=pl.CostEstimate(
            flops=flops, transcendentals=0, bytes_accessed=bytes_accessed),
    )(x_pad, w1, b1, w2, b2, w3, b3)


def init_params(key):
    """PyTorch-style uniform(+/- 1/sqrt(fan_in)) init; weights stored bf16,
    zero-padded to the lane-aligned kernel shapes (pad contributes nothing)."""
    k = jax.random.split(key, 6)

    def linear(kw, kb, fan_in, fan_out):
        bound = 1.0 / jnp.sqrt(fan_in)
        w = jax.random.uniform(kw, (fan_in, fan_out), jnp.float32, -bound, bound)
        b = jax.random.uniform(kb, (fan_out,), jnp.float32, -bound, bound)
        return w, b

    w1, b1 = linear(k[0], k[1], INPUT_SIZE, HIDDEN_SIZE)
    w2, b2 = linear(k[2], k[3], HIDDEN_SIZE, HIDDEN_SIZE)
    w3, b3 = linear(k[4], k[5], HIDDEN_SIZE, OUTPUT_SIZE)

    w1p = jnp.zeros((IN_PAD, HIDDEN_SIZE), jnp.float32).at[:INPUT_SIZE].set(w1)
    w3p = jnp.zeros((HIDDEN_SIZE, OUT_PAD), jnp.float32).at[:, :OUTPUT_SIZE].set(w3)
    b3p = jnp.zeros((OUT_PAD,), jnp.float32).at[:OUTPUT_SIZE].set(b3)

    # TODO(synk): optional fp8 (v7x) / int8 (v6e) weight storage for the
    # weight-DMA-bound small-batch path; kept bf16 for accuracy parity here.
    return dict(
        w1=w1p.astype(jnp.bfloat16), b1=b1.reshape(1, -1),
        w2=w2.astype(jnp.bfloat16), b2=b2.reshape(1, -1),
        w3=w3p.astype(jnp.bfloat16), b3=b3p.reshape(1, -1),
    )


def _build_input(state, actions_used):
    """Mirror the PyTorch concat/pad/truncate glue with a single bf16
    materialization: bf16 concat of the used features, then one jnp.pad that
    covers both the feature pad (-> IN_PAD) and the batch-row pad (-> mult of 16)."""
    if state.ndim > 2:
        state_flat = state.reshape(state.shape[0], -1)
    else:
        state_flat = state.reshape(1, -1)
    if actions_used.ndim == 1:
        actions_used = actions_used[None, :]

    bsz = state_flat.shape[0]
    sf_w = state_flat.shape[1]
    au_w = actions_used.shape[1]
    combined = sf_w + au_w

    if combined <= INPUT_SIZE:
        parts = [state_flat.astype(jnp.bfloat16), actions_used.astype(jnp.bfloat16)]
        used = combined
    else:  # truncate to INPUT_SIZE
        take_sf = min(sf_w, INPUT_SIZE)
        parts = [state_flat[:, :take_sf].astype(jnp.bfloat16)]
        take_au = INPUT_SIZE - take_sf
        if take_au > 0:
            parts.append(actions_used[:, :take_au].astype(jnp.bfloat16))
        used = INPUT_SIZE

    x = parts[0] if len(parts) == 1 else jnp.concatenate(parts, axis=1)

    b_pad = _round_up(bsz, SUBLANE)
    pad_rows = b_pad - bsz
    pad_cols = IN_PAD - used          # PyTorch zero-pad + 761->768 lane pad
    if pad_rows or pad_cols:
        x = jnp.pad(x, ((0, pad_rows), (0, pad_cols)))
    return x, bsz


def qnetwork_forward(params, state, actions_used):
    """QNetwork.forward semantics (eval mode: dropout = identity)."""
    x_pad, bsz = _build_input(state, actions_used)
    out_pad = _qnet_pallas(x_pad, params["w1"], params["b1"],
                           params["w2"], params["b2"],
                           params["w3"], params["b3"])
    # NB: padded rows / lanes contain garbage; always slice before use.
    return out_pad[:bsz, :OUTPUT_SIZE].astype(jnp.float32)


def _reference_forward(params, state, actions_used):
    """Pure-JAX reference using the same bf16 weights (f32 accumulation,
    bf16-rounded final output to match the kernel)."""
    x_pad, bsz = _build_input(state, actions_used)
    h = jnp.maximum(jnp.dot(x_pad, params["w1"], preferred_element_type=jnp.float32)
                    + params["b1"][0], 0.0).astype(jnp.bfloat16)
    h = jnp.maximum(jnp.dot(h, params["w2"], preferred_element_type=jnp.float32)
                    + params["b2"][0], 0.0).astype(jnp.bfloat16)
    out = (jnp.dot(h, params["w3"], preferred_element_type=jnp.float32)
           + params["b3"][0]).astype(jnp.bfloat16)
    return out[:bsz, :OUTPUT_SIZE].astype(jnp.float32)


if __name__ == "__main__":
    key = jax.random.PRNGKey(0)
    k_param, k_state, k_act = jax.random.split(key, 3)

    params = init_params(k_param)

    # 1) Truncation path: state (2,4,16,16) flattens to 1024 features; with 26
    #    actions_used the combined width (1050) exceeds 761, so it is truncated.
    state = jax.random.normal(k_state, (2, 4, 16, 16), jnp.float32)
    actions_used = (jax.random.uniform(k_act, (2, OUTPUT_SIZE)) > 0.5).astype(jnp.float32)
    out = jax.block_until_ready(qnetwork_forward(params, state, actions_used))
    ref = _reference_forward(params, state, actions_used)
    assert out.shape == (2, OUTPUT_SIZE), out.shape
    assert jnp.allclose(out, ref, atol=2e-2, rtol=2e-2), "mismatch (truncation path)"

    # 2) Zero-pad path: (2,16,16) flattens to 256 features; 256+26=282 < 761.
    state_small = jax.random.normal(k_state, (2, 16, 16), jnp.float32)
    out_s = jax.block_until_ready(qnetwork_forward(params, state_small, actions_used))
    ref_s = _reference_forward(params, state_small, actions_used)
    assert out_s.shape == (2, OUTPUT_SIZE), out_s.shape
    assert jnp.allclose(out_s, ref_s, atol=2e-2, rtol=2e-2), "mismatch (pad path)"

    # 3) Multi-tile + partial-last-tile path: B=300 -> b_pad=304, 2 tiles of 160.
    big_state = jax.random.normal(k_state, (300, 4, 16, 16), jnp.float32)
    big_actions = (jax.random.uniform(k_act, (300, OUTPUT_SIZE)) > 0.5).astype(jnp.float32)
    big_out = jax.block_until_ready(qnetwork_forward(params, big_state, big_actions))
    big_ref = _reference_forward(params, big_state, big_actions)
    assert big_out.shape == (300, OUTPUT_SIZE), big_out.shape
    assert jnp.allclose(big_out, big_ref, atol=2e-2, rtol=2e-2), "mismatch (big batch)"

    print("KERNEL_OK")
</pallas_src>

<mosaic_0001>
module attributes {stable_mosaic.version = 11 : i64} {
  func.func @_qnet_kernel(%arg0: i32, %arg1: memref<16x768xbf16, #tpu.memory_space<vmem>>, %arg2: memref<768x256xbf16, #tpu.memory_space<vmem>>, %arg3: memref<1x256xf32, #tpu.memory_space<vmem>>, %arg4: memref<256x256xbf16, #tpu.memory_space<vmem>>, %arg5: memref<1x256xf32, #tpu.memory_space<vmem>>, %arg6: memref<256x128xbf16, #tpu.memory_space<vmem>>, %arg7: memref<1x128xf32, #tpu.memory_space<vmem>>, %arg8: memref<16x128xbf16, #tpu.memory_space<vmem>>) attributes {dimension_semantics = [#tpu.dimension_semantics<parallel>], iteration_bounds = array<i64: 1>, scalar_prefetch = 0 : i64, scratch_operands = 0 : i64, tpu.core_type = #tpu.core_type<tc>, window_params = [{transform_indices = @transform_0, window_bounds = array<i64: 16, 768>}, {pipeline_mode = #tpu.pipeline_mode<synchronous>, transform_indices = @transform_1, window_bounds = array<i64: 768, 256>}, {pipeline_mode = #tpu.pipeline_mode<synchronous>, transform_indices = @transform_2, window_bounds = array<i64: 1, 256>}, {pipeline_mode = #tpu.pipeline_mode<synchronous>, transform_indices = @transform_3, window_bounds = array<i64: 256, 256>}, {pipeline_mode = #tpu.pipeline_mode<synchronous>, transform_indices = @transform_4, window_bounds = array<i64: 1, 256>}, {pipeline_mode = #tpu.pipeline_mode<synchronous>, transform_indices = @transform_5, window_bounds = array<i64: 256, 128>}, {pipeline_mode = #tpu.pipeline_mode<synchronous>, transform_indices = @transform_6, window_bounds = array<i64: 1, 128>}, {transform_indices = @transform_7, window_bounds = array<i64: 16, 128>}]} {
    %c0 = arith.constant 0 : index
    %c0_0 = arith.constant 0 : index
    %0 = vector.load %arg1[%c0, %c0_0] : memref<16x768xbf16, #tpu.memory_space<vmem>>, vector<16x768xbf16>
    %c0_1 = arith.constant 0 : index
    %c0_2 = arith.constant 0 : index
    %1 = vector.load %arg2[%c0_1, %c0_2] : memref<768x256xbf16, #tpu.memory_space<vmem>>, vector<768x256xbf16>
    %cst = arith.constant dense<0.000000e+00> : vector<16x256xf32>
    %2 = tpu.matmul %0, %1, %cst {dimension_numbers = #tpu.dot_dimension_numbers<[1], [0], [0], [1], [0, 0, 1, 1], [], []>} : vector<16x768xbf16>, vector<768x256xbf16>, vector<16x256xf32> -> vector<16x256xf32>
    %c0_3 = arith.constant 0 : index
    %c0_4 = arith.constant 0 : index
    %3 = vector.load %arg3[%c0_3, %c0_4] : memref<1x256xf32, #tpu.memory_space<vmem>>, vector<1x256xf32>
    %4 = vector.broadcast %3 : vector<1x256xf32> to vector<16x256xf32>
    %5 = arith.addf %2, %4 : vector<16x256xf32>
    %cst_5 = arith.constant 0.000000e+00 : f32
    %6 = vector.broadcast %cst_5 : f32 to vector<16x256xf32>
    %7 = arith.maximumf %5, %6 : vector<16x256xf32>
    %8 = arith.truncf %7 : vector<16x256xf32> to vector<16x256xbf16>
    %c0_6 = arith.constant 0 : index
    %c0_7 = arith.constant 0 : index
    %9 = vector.load %arg4[%c0_6, %c0_7] : memref<256x256xbf16, #tpu.memory_space<vmem>>, vector<256x256xbf16>
    %cst_8 = arith.constant dense<0.000000e+00> : vector<16x256xf32>
    %10 = tpu.matmul %8, %9, %cst_8 {dimension_numbers = #tpu.dot_dimension_numbers<[1], [0], [0], [1], [0, 0, 1, 1], [], []>} : vector<16x256xbf16>, vector<256x256xbf16>, vector<16x256xf32> -> vector<16x256xf32>
    %c0_9 = arith.constant 0 : index
    %c0_10 = arith.constant 0 : index
    %11 = vector.load %arg5[%c0_9, %c0_10] : memref<1x256xf32, #tpu.memory_space<vmem>>, vector<1x256xf32>
    %12 = vector.broadcast %11 : vector<1x256xf32> to vector<16x256xf32>
    %13 = arith.addf %10, %12 : vector<16x256xf32>
    %cst_11 = arith.constant 0.000000e+00 : f32
    %14 = vector.broadcast %cst_11 : f32 to vector<16x256xf32>
    %15 = arith.maximumf %13, %14 : vector<16x256xf32>
    %16 = arith.truncf %15 : vector<16x256xf32> to vector<16x256xbf16>
    %c0_12 = arith.constant 0 : index
    %c0_13 = arith.constant 0 : index
    %17 = vector.load %arg6[%c0_12, %c0_13] : memref<256x128xbf16, #tpu.memory_space<vmem>>, vector<256x128xbf16>
    %cst_14 = arith.constant dense<0.000000e+00> : vector<16x128xf32>
    %18 = tpu.matmul %16, %17, %cst_14 {dimension_numbers = #tpu.dot_dimension_numbers<[1], [0], [0], [1], [0, 0, 1, 1], [], []>} : vector<16x256xbf16>, vector<256x128xbf16>, vector<16x128xf32> -> vector<16x128xf32>
    %c0_15 = arith.constant 0 : index
    %c0_16 = arith.constant 0 : index
    %19 = vector.load %arg7[%c0_15, %c0_16] : memref<1x128xf32, #tpu.memory_space<vmem>>, vector<1x128xf32>
    %20 = vector.broadcast %19 : vector<1x128xf32> to vector<16x128xf32>
    %21 = arith.addf %18, %20 : vector<16x128xf32>
    %22 = arith.truncf %21 : vector<16x128xf32> to vector<16x128xbf16>
    %c0_17 = arith.constant 0 : index
    %c0_18 = arith.constant 0 : index
    %23 = vector.load %arg8[%c0_17, %c0_18] : memref<16x128xbf16, #tpu.memory_space<vmem>>, vector<16x128xbf16>
    tpu.vector_store %arg8[%c0_17, %c0_18], %22 {strides = array<i32>} : memref<16x128xbf16, #tpu.memory_space<vmem>>, vector<16x128xbf16>,
    return
  }
  func.func @transform_0(%arg0: i32) -> (i32, i32) {
    %c0_i32 = arith.constant 0 : i32
    %c0_i32_0 = arith.constant 0 : i32
    return %arg0, %c0_i32 : i32, i32
  }
  func.func @transform_1(%arg0: i32) -> (i32, i32) {
    %c0_i32 = arith.constant 0 : i32
    %c0_i32_0 = arith.constant 0 : i32
    %c0_i32_1 = arith.constant 0 : i32
    return %c0_i32, %c0_i32_0 : i32, i32
  }
  func.func @transform_2(%arg0: i32) -> (i32, i32) {
    %c0_i32 = arith.constant 0 : i32
    %c0_i32_0 = arith.constant 0 : i32
    %c0_i32_1 = arith.constant 0 : i32
    return %c0_i32, %c0_i32_0 : i32, i32
  }
  func.func @transform_3(%arg0: i32) -> (i32, i32) {
    %c0_i32 = arith.constant 0 : i32
    %c0_i32_0 = arith.constant 0 : i32
    %c0_i32_1 = arith.constant 0 : i32
    return %c0_i32, %c0_i32_0 : i32, i32
  }
  func.func @transform_4(%arg0: i32) -> (i32, i32) {
    %c0_i32 = arith.constant 0 : i32
    %c0_i32_0 = arith.constant 0 : i32
    %c0_i32_1 = arith.constant 0 : i32
    return %c0_i32, %c0_i32_0 : i32, i32
  }
  func.func @transform_5(%arg0: i32) -> (i32, i32) {
    %c0_i32 = arith.constant 0 : i32
    %c0_i32_0 = arith.constant 0 : i32
    %c0_i32_1 = arith.constant 0 : i32
    return %c0_i32, %c0_i32_0 : i32, i32
  }
  func.func @transform_6(%arg0: i32) -> (i32, i32) {
    %c0_i32 = arith.constant 0 : i32
    %c0_i32_0 = arith.constant 0 : i32
    %c0_i32_1 = arith.constant 0 : i32
    return %c0_i32, %c0_i32_0 : i32, i32
  }
  func.func @transform_7(%arg0: i32) -> (i32, i32) {
    %c0_i32 = arith.constant 0 : i32
    %c0_i32_0 = arith.constant 0 : i32
    return %arg0, %c0_i32 : i32, i32
  }
}

</mosaic_0001>

<llo_original>
// kernel: _qnet_pallas.1
$region0: #{_qnet_pallas.1}
  #allocation0 [shape = 'u32[]', space=smem, size = 0x4, offset = 0x4, fixed_abs, tag = 'smem constant byte address 0x4 - core index']
  #allocation1 [shape = 'u32[144,128]{1,0:T(1,128)}', space=vmem, size = 0x12000, scoped, tag = 'internal scratch']
  %s0 = inlined_call_operand.hbm [shape: bf16[16,768], index: 0, kind: input, shape index: {}]
  %s1 = inlined_call_operand.hbm [shape: bf16[768,256], index: 1, kind: input, shape index: {}]
  %s2 = inlined_call_operand.vmem [shape: f32[1,256], index: 2, kind: input, shape index: {}]
  %s3 = inlined_call_operand.hbm [shape: bf16[256,256], index: 3, kind: input, shape index: {}]
  %s4 = inlined_call_operand.vmem [shape: f32[1,256], index: 4, kind: input, shape index: {}]
  %s5 = inlined_call_operand.hbm [shape: bf16[256,128], index: 5, kind: input, shape index: {}]
  %s6 = inlined_call_operand.vmem [shape: f32[1,128], index: 6, kind: input, shape index: {}]
  %s7 = inlined_call_operand.hbm [shape: bf16[16,128], index: 7, kind: output, shape index: {}]
  %s8 = sld [smem:[#allocation0]]
  $region54: #{_qnet_pallas.1} parent=0
    _
  %s10 = ssub.s32 1, %s8
  %s11 = scalar_select 0, %s10, %s8
  $region1: #{_qnet_pallas.1} parent=0
    #allocation2 [shape = 'u8[24576]{0}', space=vmem, size = 0x6000, scoped, tag = 'input window, operand 0, single buffered']
    #allocation3 [shape = 's32[1]{0}', space=sflag, size = 0x4, scoped, tag = 'scoped memory for _qnet_pallas.1']
    #allocation4 [shape = 's32[1]{0}', space=sflag, size = 0x4, scoped, tag = 'scoped memory for _qnet_pallas.1']
    #allocation5 [shape = 'u8[393216]{0}', space=vmem, size = 0x60000, scoped, tag = 'input window, operand 1, single buffered']
    #allocation6 [shape = 's32[1]{0}', space=sflag, size = 0x4, scoped, tag = 'scoped memory for _qnet_pallas.1']
    #allocation7 [shape = 'u8[131072]{0}', space=vmem, size = 0x20000, scoped, tag = 'input window, operand 3, single buffered']
    #allocation8 [shape = 'u8[65536]{0}', space=vmem, size = 0x10000, scoped, tag = 'input window, operand 5, single buffered']
    #allocation9 [shape = 's32[1]{0}', space=sflag, size = 0x4, scoped, tag = 'scoped memory for _qnet_pallas.1']
    #allocation10 [shape = 'u8[4096]{0}', space=vmem, size = 0x1000, scoped, tag = 'output window, operand 0, single buffered']
    %12 = vsyncpa [#allocation3], 0
    %13 = vsyncpa [#allocation6], 0
    %14 = vsyncpa [#allocation9], 0
    %15 = vsyncpa [#allocation4], 0
    // Predicated region
    $region2: #{_qnet_pallas.1} parent=1 // pred_check
      _
    $region3: #{_qnet_pallas.1} parent=1 // pred_check_branch
      %17 = sbr.rel (0) target = $region5
    $region4: #{_qnet_pallas.1} parent=1 // pred_region
      %s19 = ssub.s32 768, 768
      %20 = vsyncadd [#allocation3], %s19
      %s21 = sshll.u32 [#allocation2], 4
      %s22 = int_to_ptr.vmem [resolvable:$true] %s21
      %27 = dma.hbm_to_vmem [thread:$0]  %s0, 768, %s22, [#allocation3], 384, 384, 24
    $region5: #{_qnet_pallas.1} parent=1 // pred_fallthru
      _
    // Predicated region
    $region6: #{_qnet_pallas.1} parent=1 // pred_check
      _
    $region7: #{_qnet_pallas.1} parent=1 // pred_check_branch
      %29 = sbr.rel (0) target = $region9
    $region8: #{_qnet_pallas.1} parent=1 // pred_region
      %s31 = ssub.s32 12288, 12288
      %32 = vsyncadd [#allocation6], %s31
      %s33 = sshll.u32 [#allocation5], 4
      %s34 = int_to_ptr.vmem [resolvable:$true] %s33
      %39 = dma.hbm_to_vmem [thread:$0]  %s1, 12288, %s34, [#allocation6], 128, 128, 8
    $region9: #{_qnet_pallas.1} parent=1 // pred_fallthru
      _
    // Predicated region
    $region10: #{_qnet_pallas.1} parent=1 // pred_check
      _
    $region11: #{_qnet_pallas.1} parent=1 // pred_check_branch
      %41 = sbr.rel (0) target = $region13
    $region12: #{_qnet_pallas.1} parent=1 // pred_region
      _
    $region13: #{_qnet_pallas.1} parent=1 // pred_fallthru
      _
    // Predicated region
    $region14: #{_qnet_pallas.1} parent=1 // pred_check
      _
    $region15: #{_qnet_pallas.1} parent=1 // pred_check_branch
      %43 = sbr.rel (0) target = $region17
    $region16: #{_qnet_pallas.1} parent=1 // pred_region
      %s45 = ssub.s32 4096, 4096
      %46 = vsyncadd [#allocation6], %s45
      %s47 = sshll.u32 [#allocation7], 4
      %s48 = int_to_ptr.vmem [resolvable:$true] %s47
      %53 = dma.hbm_to_vmem [thread:$0]  %s3, 4096, %s48, [#allocation6], 128, 128, 8
    $region17: #{_qnet_pallas.1} parent=1 // pred_fallthru
      _
    // Predicated region
    $region18: #{_qnet_pallas.1} parent=1 // pred_check
      _
    $region19: #{_qnet_pallas.1} parent=1 // pred_check_branch
      %55 = sbr.rel (0) target = $region21
    $region20: #{_qnet_pallas.1} parent=1 // pred_region
      _
    $region21: #{_qnet_pallas.1} parent=1 // pred_fallthru
      _
    // Predicated region
    $region22: #{_qnet_pallas.1} parent=1 // pred_check
      _
    $region23: #{_qnet_pallas.1} parent=1 // pred_check_branch
      %57 = sbr.rel (0) target = $region25
    $region24: #{_qnet_pallas.1} parent=1 // pred_region
      %s59 = ssub.s32 2048, 2048
      %60 = vsyncadd [#allocation9], %s59
      %s61 = sshll.u32 [#allocation8], 4
      %s62 = int_to_ptr.vmem [resolvable:$true] %s61
      %67 = dma.hbm_to_vmem [thread:$0]  %s5, 2048, %s62, [#allocation9], 64, 64, 4
    $region25: #{_qnet_pallas.1} parent=1 // pred_fallthru
      _
    // Predicated region
    $region26: #{_qnet_pallas.1} parent=1 // pred_check
      _
    $region27: #{_qnet_pallas.1} parent=1 // pred_check_branch
      %69 = sbr.rel (0) target = $region29
    $region28: #{_qnet_pallas.1} parent=1 // pred_region
      _
    $region29: #{_qnet_pallas.1} parent=1 // pred_fallthru
      _
    // Predicated region
    $region30: #{_qnet_pallas.1} parent=1 // pred_check
      _
    $region31: #{_qnet_pallas.1} parent=1 // pred_check_branch
      %71 = sbr.rel (0) target = $region33
    $region32: #{_qnet_pallas.1} parent=1 // pred_region
      %72 = dma.done [#allocation3], 768
    $region33: #{_qnet_pallas.1} parent=1 // pred_fallthru
      _
    // Predicated region
    $region34: #{_qnet_pallas.1} parent=1 // pred_check
      _
    $region35: #{_qnet_pallas.1} parent=1 // pred_check_branch
      %74 = sbr.rel (0) target = $region37
    $region36: #{_qnet_pallas.1} parent=1 // pred_region
      %75 = dma.done [#allocation6], 12288
    $region37: #{_qnet_pallas.1} parent=1 // pred_fallthru
      _
    // Predicated region
    $region38: #{_qnet_pallas.1} parent=1 // pred_check
      _
    $region39: #{_qnet_pallas.1} parent=1 // pred_check_branch
      %77 = sbr.rel (0) target = $region41
    $region40: #{_qnet_pallas.1} parent=1 // pred_region
      %78 = dma.done [#allocation6], 4096
    $region41: #{_qnet_pallas.1} parent=1 // pred_fallthru
      _
    // Predicated region
    $region42: #{_qnet_pallas.1} parent=1 // pred_check
      _
    $region43: #{_qnet_pallas.1} parent=1 // pred_check_branch
      %80 = sbr.rel (0) target = $region45
    $region44: #{_qnet_pallas.1} parent=1 // pred_region
      %81 = dma.done [#allocation9], 2048
    $region45: #{_qnet_pallas.1} parent=1 // pred_fallthru
      _
    %v83 = vld [vmem:[#allocation2] sm:$0xff]
    %v84 = vld [vmem:[#allocation2 + $0x8] sm:$0xff]
    %v85 = vld [vmem:[#allocation2 + $0x10] sm:$0xff]
    %v86 = vld [vmem:[#allocation2 + $0x18] sm:$0xff]
    %v87 = vld [vmem:[#allocation2 + $0x20] sm:$0xff]
    %v88 = vld [vmem:[#allocation2 + $0x28] sm:$0xff]
    %v89 = vld [vmem:[#allocation5] sm:$0xff]
    %v90 = vld [vmem:[#allocation5 + $0x8] sm:$0xff]
    %v91 = vld [vmem:[#allocation5 + $0x10] sm:$0xff]
    %v92 = vld [vmem:[#allocation5 + $0x18] sm:$0xff]
    %v93 = vld [vmem:[#allocation5 + $0x20] sm:$0xff]
    %v94 = vld [vmem:[#allocation5 + $0x28] sm:$0xff]
    %v95 = vld [vmem:[#allocation5 + $0x30] sm:$0xff]
    %v96 = vld [vmem:[#allocation5 + $0x38] sm:$0xff]
    %v97 = vld [vmem:[#allocation5 + $0x40] sm:$0xff]
    %v98 = vld [vmem:[#allocation5 + $0x48] sm:$0xff]
    %v99 = vld [vmem:[#allocation5 + $0x50] sm:$0xff]
    %v100 = vld [vmem:[#allocation5 + $0x58] sm:$0xff]
    %v101 = vld [vmem:[#allocation5 + $0x60] sm:$0xff]
    %v102 = vld [vmem:[#allocation5 + $0x68] sm:$0xff]
    %v103 = vld [vmem:[#allocation5 + $0x70] sm:$0xff]
    %v104 = vld [vmem:[#allocation5 + $0x78] sm:$0xff]
    %v105 = vld [vmem:[#allocation5 + $0x80] sm:$0xff]
    %v106 = vld [vmem:[#allocation5 + $0x88] sm:$0xff]
    %v107 = vld [vmem:[#allocation5 + $0x90] sm:$0xff]
    %v108 = vld [vmem:[#allocation5 + $0x98] sm:$0xff]
    %v109 = vld [vmem:[#allocation5 + $0xa0] sm:$0xff]
    %v110 = vld [vmem:[#allocation5 + $0xa8] sm:$0xff]
    %v111 = vld [vmem:[#allocation5 + $0xb0] sm:$0xff]
    %v112 = vld [vmem:[#allocation5 + $0xb8] sm:$0xff]
    %v113 = vld [vmem:[#allocation5 + $0xc0] sm:$0xff]
    %v114 = vld [vmem:[#allocation5 + $0xc8] sm:$0xff]
    %v115 = vld [vmem:[#allocation5 + $0xd0] sm:$0xff]
    %v116 = vld [vmem:[#allocation5 + $0xd8] sm:$0xff]
    %v117 = vld [vmem:[#allocation5 + $0xe0] sm:$0xff]
    %v118 = vld [vmem:[#allocation5 + $0xe8] sm:$0xff]
    %v119 = vld [vmem:[#allocation5 + $0xf0] sm:$0xff]
    %v120 = vld [vmem:[#allocation5 + $0xf8] sm:$0xff]
    %v121 = vld [vmem:[#allocation5 + $0x100] sm:$0xff]
    %v122 = vld [vmem:[#allocation5 + $0x108] sm:$0xff]
    %v123 = vld [vmem:[#allocation5 + $0x110] sm:$0xff]
    %v124 = vld [vmem:[#allocation5 + $0x118] sm:$0xff]
    %v125 = vld [vmem:[#allocation5 + $0x120] sm:$0xff]
    %v126 = vld [vmem:[#allocation5 + $0x128] sm:$0xff]
    %v127 = vld [vmem:[#allocation5 + $0x130] sm:$0xff]
    %v128 = vld [vmem:[#allocation5 + $0x138] sm:$0xff]
    %v129 = vld [vmem:[#allocation5 + $0x140] sm:$0xff]
    %v130 = vld [vmem:[#allocation5 + $0x148] sm:$0xff]
    %v131 = vld [vmem:[#allocation5 + $0x150] sm:$0xff]
    %v132 = vld [vmem:[#allocation5 + $0x158] sm:$0xff]
    %v133 = vld [vmem:[#allocation5 + $0x160] sm:$0xff]
    %v134 = vld [vmem:[#allocation5 + $0x168] sm:$0xff]
    %v135 = vld [vmem:[#allocation5 + $0x170] sm:$0xff]
    %v136 = vld [vmem:[#allocation5 + $0x178] sm:$0xff]
    %v137 = vld [vmem:[#allocation5 + $0x180] sm:$0xff]
    %v138 = vld [vmem:[#allocation5 + $0x188] sm:$0xff]
    %v139 = vld [vmem:[#allocation5 + $0x190] sm:$0xff]
    %v140 = vld [vmem:[#allocation5 + $0x198] sm:$0xff]
    %v141 = vld [vmem:[#allocation5 + $0x1a0] sm:$0xff]
    %v142 = vld [vmem:[#allocation5 + $0x1a8] sm:$0xff]
    %v143 = vld [vmem:[#allocation5 + $0x1b0] sm:$0xff]
    %v144 = vld [vmem:[#allocation5 + $0x1b8] sm:$0xff]
    %v145 = vld [vmem:[#allocation5 + $0x1c0] sm:$0xff]
    %v146 = vld [vmem:[#allocation5 + $0x1c8] sm:$0xff]
    %v147 = vld [vmem:[#allocation5 + $0x1d0] sm:$0xff]
    %v148 = vld [vmem:[#allocation5 + $0x1d8] sm:$0xff]
    %v149 = vld [vmem:[#allocation5 + $0x1e0] sm:$0xff]
    %v150 = vld [vmem:[#allocation5 + $0x1e8] sm:$0xff]
    %v151 = vld [vmem:[#allocation5 + $0x1f0] sm:$0xff]
    %v152 = vld [vmem:[#allocation5 + $0x1f8] sm:$0xff]
    %v153 = vld [vmem:[#allocation5 + $0x200] sm:$0xff]
    %v154 = vld [vmem:[#allocation5 + $0x208] sm:$0xff]
    %v155 = vld [vmem:[#allocation5 + $0x210] sm:$0xff]
    %v156 = vld [vmem:[#allocation5 + $0x218] sm:$0xff]
    %v157 = vld [vmem:[#allocation5 + $0x220] sm:$0xff]
    %v158 = vld [vmem:[#allocation5 + $0x228] sm:$0xff]
    %v159 = vld [vmem:[#allocation5 + $0x230] sm:$0xff]
    %v160 = vld [vmem:[#allocation5 + $0x238] sm:$0xff]
    %v161 = vld [vmem:[#allocation5 + $0x240] sm:$0xff]
    %v162 = vld [vmem:[#allocation5 + $0x248] sm:$0xff]
    %v163 = vld [vmem:[#allocation5 + $0x250] sm:$0xff]
    %v164 = vld [vmem:[#allocation5 + $0x258] sm:$0xff]
    %v165 = vld [vmem:[#allocation5 + $0x260] sm:$0xff]
    %v166 = vld [vmem:[#allocation5 + $0x268] sm:$0xff]
    %v167 = vld [vmem:[#allocation5 + $0x270] sm:$0xff]
    %v168 = vld [vmem:[#allocation5 + $0x278] sm:$0xff]
    %v169 = vld [vmem:[#allocation5 + $0x280] sm:$0xff]
    %v170 = vld [vmem:[#allocation5 + $0x288] sm:$0xff]
    %v171 = vld [vmem:[#allocation5 + $0x290] sm:$0xff]
    %v172 = vld [vmem:[#allocation5 + $0x298] sm:$0xff]
    %v173 = vld [vmem:[#allocation5 + $0x2a0] sm:$0xff]
    %v174 = vld [vmem:[#allocation5 + $0x2a8] sm:$0xff]
    %v175 = vld [vmem:[#allocation5 + $0x2b0] sm:$0xff]
    %v176 = vld [vmem:[#allocation5 + $0x2b8] sm:$0xff]
    %v177 = vld [vmem:[#allocation5 + $0x2c0] sm:$0xff]
    %v178 = vld [vmem:[#allocation5 + $0x2c8] sm:$0xff]
    %v179 = vld [vmem:[#allocation5 + $0x2d0] sm:$0xff]
    %v180 = vld [vmem:[#allocation5 + $0x2d8] sm:$0xff]
    %v181 = vld [vmem:[#allocation5 + $0x2e0] sm:$0xff]
    %v182 = vld [vmem:[#allocation5 + $0x2e8] sm:$0xff]
    %v183 = vld [vmem:[#allocation5 + $0x2f0] sm:$0xff]
    %v184 = vld [vmem:[#allocation5 + $0x2f8] sm:$0xff]
    %v185 = vld [vmem:[%s2] sm:$0x3]
    %v187 = vlaneseq
    %v188 = vshrl.u32 %v187, 7
    %v189 = vsub.s32 0, %v188
    %v190 = vrot.slane %v185, %v189
    %v191 = vlaneseq
    %v192 = vshrl.u32 %v191, 7
    %v193 = vsub.s32 1, %v192
    %v194 = vrot.slane %v185, %v193
    %v203 = vunpack.c.l.b16 %v83
    %v204 = vunpack.c.h.b16 %v83
    %v205 = vunpack.c.l.b16 %v84
    %v206 = vunpack.c.h.b16 %v84
    %v207 = vunpack.c.l.b16 %v85
    %v208 = vunpack.c.h.b16 %v85
    %v209 = vunpack.c.l.b16 %v86
    %v210 = vunpack.c.h.b16 %v86
    %v211 = vunpack.c.l.b16 %v87
    %v212 = vunpack.c.h.b16 %v87
    %v213 = vunpack.c.l.b16 %v88
    %v214 = vunpack.c.h.b16 %v88
    %v215 = vpack.c.b16 %v209, %v203
    %v216 = vpack.c.b16 %v210, %v204
    %v217 = vpack.c.b16 %v211, %v205
    %v218 = vpack.c.b16 %v212, %v206
    %v219 = vpack.c.b16 %v213, %v207
    %v220 = vpack.c.b16 %v214, %v208
    %v323 = vunpack.c.l.b16 %v89
    %v324 = vunpack.c.h.b16 %v89
    %v325 = vunpack.c.l.b16 %v90
    %v326 = vunpack.c.h.b16 %v90
    %v327 = vunpack.c.l.b16 %v91
    %v328 = vunpack.c.h.b16 %v91
    %v329 = vunpack.c.l.b16 %v92
    %v330 = vunpack.c.h.b16 %v92
    %v331 = vunpack.c.l.b16 %v93
    %v332 = vunpack.c.h.b16 %v93
    %v333 = vunpack.c.l.b16 %v94
    %v334 = vunpack.c.h.b16 %v94
    %v335 = vunpack.c.l.b16 %v95
    %v336 = vunpack.c.h.b16 %v95
    %v337 = vunpack.c.l.b16 %v96
    %v338 = vunpack.c.h.b16 %v96
    %v339 = vunpack.c.l.b16 %v97
    %v340 = vunpack.c.h.b16 %v97
    %v341 = vunpack.c.l.b16 %v98
    %v342 = vunpack.c.h.b16 %v98
    %v343 = vunpack.c.l.b16 %v99
    %v344 = vunpack.c.h.b16 %v99
    %v345 = vunpack.c.l.b16 %v100
    %v346 = vunpack.c.h.b16 %v100
    %v347 = vunpack.c.l.b16 %v101
    %v348 = vunpack.c.h.b16 %v101
    %v349 = vunpack.c.l.b16 %v102
    %v350 = vunpack.c.h.b16 %v102
    %v351 = vunpack.c.l.b16 %v103
    %v352 = vunpack.c.h.b16 %v103
    %v353 = vunpack.c.l.b16 %v104
    %v354 = vunpack.c.h.b16 %v104
    %v355 = vunpack.c.l.b16 %v105
    %v356 = vunpack.c.h.b16 %v105
    %v357 = vunpack.c.l.b16 %v106
    %v358 = vunpack.c.h.b16 %v106
    %v359 = vunpack.c.l.b16 %v107
    %v360 = vunpack.c.h.b16 %v107
    %v361 = vunpack.c.l.b16 %v108
    %v362 = vunpack.c.h.b16 %v108
    %v363 = vunpack.c.l.b16 %v109
    %v364 = vunpack.c.h.b16 %v109
    %v365 = vunpack.c.l.b16 %v110
    %v366 = vunpack.c.h.b16 %v110
    %v367 = vunpack.c.l.b16 %v111
    %v368 = vunpack.c.h.b16 %v111
    %v369 = vunpack.c.l.b16 %v112
    %v370 = vunpack.c.h.b16 %v112
    %v371 = vunpack.c.l.b16 %v113
    %v372 = vunpack.c.h.b16 %v113
    %v373 = vunpack.c.l.b16 %v114
    %v374 = vunpack.c.h.b16 %v114
    %v375 = vunpack.c.l.b16 %v115
    %v376 = vunpack.c.h.b16 %v115
    %v377 = vunpack.c.l.b16 %v116
    %v378 = vunpack.c.h.b16 %v116
    %v379 = vunpack.c.l.b16 %v117
    %v380 = vunpack.c.h.b16 %v117
    %v381 = vunpack.c.l.b16 %v118
    %v382 = vunpack.c.h.b16 %v118
    %v383 = vunpack.c.l.b16 %v119
    %v384 = vunpack.c.h.b16 %v119
    %v385 = vunpack.c.l.b16 %v120
    %v386 = vunpack.c.h.b16 %v120
    %v387 = vunpack.c.l.b16 %v121
    %v388 = vunpack.c.h.b16 %v121
    %v389 = vunpack.c.l.b16 %v122
    %v390 = vunpack.c.h.b16 %v122
    %v391 = vunpack.c.l.b16 %v123
    %v392 = vunpack.c.h.b16 %v123
    %v393 = vunpack.c.l.b16 %v124
    %v394 = vunpack.c.h.b16 %v124
    %v395 = vunpack.c.l.b16 %v125
    %v396 = vunpack.c.h.b16 %v125
    %v397 = vunpack.c.l.b16 %v126
    %v398 = vunpack.c.h.b16 %v126
    %v399 = vunpack.c.l.b16 %v127
    %v400 = vunpack.c.h.b16 %v127
    %v401 = vunpack.c.l.b16 %v128
    %v402 = vunpack.c.h.b16 %v128
    %v403 = vunpack.c.l.b16 %v129
    %v404 = vunpack.c.h.b16 %v129
    %v405 = vunpack.c.l.b16 %v130
    %v406 = vunpack.c.h.b16 %v130
    %v407 = vunpack.c.l.b16 %v131
    %v408 = vunpack.c.h.b16 %v131
    %v409 = vunpack.c.l.b16 %v132
    %v410 = vunpack.c.h.b16 %v132
    %v411 = vunpack.c.l.b16 %v133
    %v412 = vunpack.c.h.b16 %v133
    %v413 = vunpack.c.l.b16 %v134
    %v414 = vunpack.c.h.b16 %v134
    %v415 = vunpack.c.l.b16 %v135
    %v416 = vunpack.c.h.b16 %v135
    %v417 = vunpack.c.l.b16 %v136
    %v418 = vunpack.c.h.b16 %v136
    %v419 = vunpack.c.l.b16 %v137
    %v420 = vunpack.c.h.b16 %v137
    %v421 = vunpack.c.l.b16 %v138
    %v422 = vunpack.c.h.b16 %v138
    %v423 = vunpack.c.l.b16 %v139
    %v424 = vunpack.c.h.b16 %v139
    %v425 = vunpack.c.l.b16 %v140
    %v426 = vunpack.c.h.b16 %v140
    %v427 = vunpack.c.l.b16 %v141
    %v428 = vunpack.c.h.b16 %v141
    %v429 = vunpack.c.l.b16 %v142
    %v430 = vunpack.c.h.b16 %v142
    %v431 = vunpack.c.l.b16 %v143
    %v432 = vunpack.c.h.b16 %v143
    %v433 = vunpack.c.l.b16 %v144
    %v434 = vunpack.c.h.b16 %v144
    %v435 = vunpack.c.l.b16 %v145
    %v436 = vunpack.c.h.b16 %v145
    %v437 = vunpack.c.l.b16 %v146
    %v438 = vunpack.c.h.b16 %v146
    %v439 = vunpack.c.l.b16 %v147
    %v440 = vunpack.c.h.b16 %v147
    %v441 = vunpack.c.l.b16 %v148
    %v442 = vunpack.c.h.b16 %v148
    %v443 = vunpack.c.l.b16 %v149
    %v444 = vunpack.c.h.b16 %v149
    %v445 = vunpack.c.l.b16 %v150
    %v446 = vunpack.c.h.b16 %v150
    %v447 = vunpack.c.l.b16 %v151
    %v448 = vunpack.c.h.b16 %v151
    %v449 = vunpack.c.l.b16 %v152
    %v450 = vunpack.c.h.b16 %v152
    %v451 = vunpack.c.l.b16 %v153
    %v452 = vunpack.c.h.b16 %v153
    %v453 = vunpack.c.l.b16 %v154
    %v454 = vunpack.c.h.b16 %v154
    %v455 = vunpack.c.l.b16 %v155
    %v456 = vunpack.c.h.b16 %v155
    %v457 = vunpack.c.l.b16 %v156
    %v458 = vunpack.c.h.b16 %v156
    %v459 = vunpack.c.l.b16 %v157
    %v460 = vunpack.c.h.b16 %v157
    %v461 = vunpack.c.l.b16 %v158
    %v462 = vunpack.c.h.b16 %v158
    %v463 = vunpack.c.l.b16 %v159
    %v464 = vunpack.c.h.b16 %v159
    %v465 = vunpack.c.l.b16 %v160
    %v466 = vunpack.c.h.b16 %v160
    %v467 = vunpack.c.l.b16 %v161
    %v468 = vunpack.c.h.b16 %v161
    %v469 = vunpack.c.l.b16 %v162
    %v470 = vunpack.c.h.b16 %v162
    %v471 = vunpack.c.l.b16 %v163
    %v472 = vunpack.c.h.b16 %v163
    %v473 = vunpack.c.l.b16 %v164
    %v474 = vunpack.c.h.b16 %v164
    %v475 = vunpack.c.l.b16 %v165
    %v476 = vunpack.c.h.b16 %v165
    %v477 = vunpack.c.l.b16 %v166
    %v478 = vunpack.c.h.b16 %v166
    %v479 = vunpack.c.l.b16 %v167
    %v480 = vunpack.c.h.b16 %v167
    %v481 = vunpack.c.l.b16 %v168
    %v482 = vunpack.c.h.b16 %v168
    %v483 = vunpack.c.l.b16 %v169
    %v484 = vunpack.c.h.b16 %v169
    %v485 = vunpack.c.l.b16 %v170
    %v486 = vunpack.c.h.b16 %v170
    %v487 = vunpack.c.l.b16 %v171
    %v488 = vunpack.c.h.b16 %v171
    %v489 = vunpack.c.l.b16 %v172
    %v490 = vunpack.c.h.b16 %v172
    %v491 = vunpack.c.l.b16 %v173
    %v492 = vunpack.c.h.b16 %v173
    %v493 = vunpack.c.l.b16 %v174
    %v494 = vunpack.c.h.b16 %v174
    %v495 = vunpack.c.l.b16 %v175
    %v496 = vunpack.c.h.b16 %v175
    %v497 = vunpack.c.l.b16 %v176
    %v498 = vunpack.c.h.b16 %v176
    %v499 = vunpack.c.l.b16 %v177
    %v500 = vunpack.c.h.b16 %v177
    %v501 = vunpack.c.l.b16 %v178
    %v502 = vunpack.c.h.b16 %v178
    %v503 = vunpack.c.l.b16 %v179
    %v504 = vunpack.c.h.b16 %v179
    %v505 = vunpack.c.l.b16 %v180
    %v506 = vunpack.c.h.b16 %v180
    %v507 = vunpack.c.l.b16 %v181
    %v508 = vunpack.c.h.b16 %v181
    %v509 = vunpack.c.l.b16 %v182
    %v510 = vunpack.c.h.b16 %v182
    %v511 = vunpack.c.l.b16 %v183
    %v512 = vunpack.c.h.b16 %v183
    %v513 = vunpack.c.l.b16 %v184
    %v514 = vunpack.c.h.b16 %v184
    %v515 = vpack.c.b16 %v325, %v323
    %v516 = vpack.c.b16 %v326, %v324
    %v517 = vpack.c.b16 %v329, %v327
    %v518 = vpack.c.b16 %v330, %v328
    %v519 = vpack.c.b16 %v333, %v331
    %v520 = vpack.c.b16 %v334, %v332
    %v521 = vpack.c.b16 %v337, %v335
    %v522 = vpack.c.b16 %v338, %v336
    %v523 = vpack.c.b16 %v341, %v339
    %v524 = vpack.c.b16 %v342, %v340
    %v525 = vpack.c.b16 %v345, %v343
    %v526 = vpack.c.b16 %v346, %v344
    %v527 = vpack.c.b16 %v349, %v347
    %v528 = vpack.c.b16 %v350, %v348
    %v529 = vpack.c.b16 %v353, %v351
    %v530 = vpack.c.b16 %v354, %v352
    %v531 = vpack.c.b16 %v357, %v355
    %v532 = vpack.c.b16 %v358, %v356
    %v533 = vpack.c.b16 %v361, %v359
    %v534 = vpack.c.b16 %v362, %v360
    %v535 = vpack.c.b16 %v365, %v363
    %v536 = vpack.c.b16 %v366, %v364
    %v537 = vpack.c.b16 %v369, %v367
    %v538 = vpack.c.b16 %v370, %v368
    %v539 = vpack.c.b16 %v373, %v371
    %v540 = vpack.c.b16 %v374, %v372
    %v541 = vpack.c.b16 %v377, %v375
    %v542 = vpack.c.b16 %v378, %v376
    %v543 = vpack.c.b16 %v381, %v379
    %v544 = vpack.c.b16 %v382, %v380
    %v545 = vpack.c.b16 %v385, %v383
    %v546 = vpack.c.b16 %v386, %v384
    %v547 = vpack.c.b16 %v389, %v387
    %v548 = vpack.c.b16 %v390, %v388
    %v549 = vpack.c.b16 %v393, %v391
    %v550 = vpack.c.b16 %v394, %v392
    %v551 = vpack.c.b16 %v397, %v395
    %v552 = vpack.c.b16 %v398, %v396
    %v553 = vpack.c.b16 %v401, %v399
    %v554 = vpack.c.b16 %v402, %v400
    %v555 = vpack.c.b16 %v405, %v403
    %v556 = vpack.c.b16 %v406, %v404
    %v557 = vpack.c.b16 %v409, %v407
    %v558 = vpack.c.b16 %v410, %v408
    %v559 = vpack.c.b16 %v413, %v411
    %v560 = vpack.c.b16 %v414, %v412
    %v561 = vpack.c.b16 %v417, %v415
    %v562 = vpack.c.b16 %v418, %v416
    %v563 = vpack.c.b16 %v421, %v419
    %v564 = vpack.c.b16 %v422, %v420
    %v565 = vpack.c.b16 %v425, %v423
    %v566 = vpack.c.b16 %v426, %v424
    %v567 = vpack.c.b16 %v429, %v427
    %v568 = vpack.c.b16 %v430, %v428
    %v569 = vpack.c.b16 %v433, %v431
    %v570 = vpack.c.b16 %v434, %v432
    %v571 = vpack.c.b16 %v437, %v435
    %v572 = vpack.c.b16 %v438, %v436
    %v573 = vpack.c.b16 %v441, %v439
    %v574 = vpack.c.b16 %v442, %v440
    %v575 = vpack.c.b16 %v445, %v443
    %v576 = vpack.c.b16 %v446, %v444
    %v577 = vpack.c.b16 %v449, %v447
    %v578 = vpack.c.b16 %v450, %v448
    %v579 = vpack.c.b16 %v453, %v451
    %v580 = vpack.c.b16 %v454, %v452
    %v581 = vpack.c.b16 %v457, %v455
    %v582 = vpack.c.b16 %v458, %v456
    %v583 = vpack.c.b16 %v461, %v459
    %v584 = vpack.c.b16 %v462, %v460
    %v585 = vpack.c.b16 %v465, %v463
    %v586 = vpack.c.b16 %v466, %v464
    %v587 = vpack.c.b16 %v469, %v467
    %v588 = vpack.c.b16 %v470, %v468
    %v589 = vpack.c.b16 %v473, %v471
    %v590 = vpack.c.b16 %v474, %v472
    %v591 = vpack.c.b16 %v477, %v475
    %v592 = vpack.c.b16 %v478, %v476
    %v593 = vpack.c.b16 %v481, %v479
    %v594 = vpack.c.b16 %v482, %v480
    %v595 = vpack.c.b16 %v485, %v483
    %v596 = vpack.c.b16 %v486, %v484
    %v597 = vpack.c.b16 %v489, %v487
    %v598 = vpack.c.b16 %v490, %v488
    %v599 = vpack.c.b16 %v493, %v491
    %v600 = vpack.c.b16 %v494, %v492
    %v601 = vpack.c.b16 %v497, %v495
    %v602 = vpack.c.b16 %v498, %v496
    %v603 = vpack.c.b16 %v501, %v499
    %v604 = vpack.c.b16 %v502, %v500
    %v605 = vpack.c.b16 %v505, %v503
    %v606 = vpack.c.b16 %v506, %v504
    %v607 = vpack.c.b16 %v509, %v507
    %v608 = vpack.c.b16 %v510, %v508
    %v609 = vpack.c.b16 %v513, %v511
    %v610 = vpack.c.b16 %v514, %v512
    %707 = vmatprep.subr.bf16.mxu0 %v530
    %708 = vmatpush1.bf16.msra.mxu0 %v529
    %709 = vmatprep.subr.bf16.mxu0 %v528
    %710 = vmatpush1.bf16.msra.mxu0 %v527
    %711 = vmatprep.subr.bf16.mxu0 %v526
    %712 = vmatpush1.bf16.msra.mxu0 %v525
    %713 = vmatprep.subr.bf16.mxu0 %v524
    %714 = vmatpush1.bf16.msra.mxu0 %v523
    %715 = vmatprep.subr.bf16.mxu0 %v522
    %716 = vmatpush1.bf16.msra.mxu0 %v521
    %717 = vmatprep.subr.bf16.mxu0 %v520
    %718 = vmatpush1.bf16.msra.mxu0 %v519
    %719 = vmatprep.subr.bf16.mxu0 %v518
    %720 = vmatpush1.bf16.msra.mxu0 %v517
    %721 = vmatprep.subr.bf16.mxu0 %v516
    %722 = vmatpush1.bf16.msra.mxu0 %v515
    %723 = vmatprep.subr.bf16.mxu0 %v546
    %724 = vmatpush2.bf16.msra.mxu0 %v545
    %725 = vmatprep.subr.bf16.mxu0 %v544
    %726 = vmatpush2.bf16.msra.mxu0 %v543
    %727 = vmatprep.subr.bf16.mxu0 %v542
    %728 = vmatpush2.bf16.msra.mxu0 %v541
    %729 = vmatprep.subr.bf16.mxu0 %v540
    %730 = vmatpush2.bf16.msra.mxu0 %v539
    %731 = vmatprep.subr.bf16.mxu0 %v538
    %732 = vmatpush2.bf16.msra.mxu0 %v537
    %733 = vmatprep.subr.bf16.mxu0 %v536
    %734 = vmatpush2.bf16.msra.mxu0 %v535
    %735 = vmatprep.subr.bf16.mxu0 %v534
    %736 = vmatpush2.bf16.msra.mxu0 %v533
    %737 = vmatprep.subr.bf16.mxu0 %v532
    %738 = vmatpush2.bf16.msra.mxu0 %v531
    %739 = vmatprep.mubr.bf16.mxu0 %v216
    %740 = vmatmul.mubr.bf16.gmra.mxu0 %v215
    %v741 = vpop.f32.mrf.mxu0
    %v742 = vadd.f32 %v190, %v741
    %v743 = vpop.f32.mrf.mxu0
    %v744 = vadd.f32 %v194, %v743
    %v745 = vpop.f32.mrf.mxu0
    %v746 = vadd.f32 %v190, %v745
    %v747 = vpop.f32.mrf.mxu0
    %v748 = vadd.f32 %v194, %v747
    %749 = vdwg.mxu0
    %750 = vmatprep.subr.bf16.mxu0 %v562
    %751 = vmatpush1.bf16.msra.mxu0 %v561
    %752 = vmatprep.subr.bf16.mxu0 %v560
    %753 = vmatpush1.bf16.msra.mxu0 %v559
    %754 = vmatprep.subr.bf16.mxu0 %v558
    %755 = vmatpush1.bf16.msra.mxu0 %v557
    %756 = vmatprep.subr.bf16.mxu0 %v556
    %757 = vmatpush1.bf16.msra.mxu0 %v555
    %758 = vmatprep.subr.bf16.mxu0 %v554
    %759 = vmatpush1.bf16.msra.mxu0 %v553
    %760 = vmatprep.subr.bf16.mxu0 %v552
    %761 = vmatpush1.bf16.msra.mxu0 %v551
    %762 = vmatprep.subr.bf16.mxu0 %v550
    %763 = vmatpush1.bf16.msra.mxu0 %v549
    %764 = vmatprep.subr.bf16.mxu0 %v548
    %765 = vmatpush1.bf16.msra.mxu0 %v547
    %766 = vmatprep.subr.bf16.mxu0 %v578
    %767 = vmatpush2.bf16.msra.mxu0 %v577
    %768 = vmatprep.subr.bf16.mxu0 %v576
    %769 = vmatpush2.bf16.msra.mxu0 %v575
    %770 = vmatprep.subr.bf16.mxu0 %v574
    %771 = vmatpush2.bf16.msra.mxu0 %v573
    %772 = vmatprep.subr.bf16.mxu0 %v572
    %773 = vmatpush2.bf16.msra.mxu0 %v571
    %774 = vmatprep.subr.bf16.mxu0 %v570
    %775 = vmatpush2.bf16.msra.mxu0 %v569
    %776 = vmatprep.subr.bf16.mxu0 %v568
    %777 = vmatpush2.bf16.msra.mxu0 %v567
    %778 = vmatprep.subr.bf16.mxu0 %v566
    %779 = vmatpush2.bf16.msra.mxu0 %v565
    %780 = vmatprep.subr.bf16.mxu0 %v564
    %781 = vmatpush2.bf16.msra.mxu0 %v563
    %782 = vmatprep.mubr.bf16.mxu0 %v218
    %783 = vmatmul.mubr.bf16.gmra.mxu0 %v217
    %v784 = vpop.f32.mrf.mxu0
    %v785 = vadd.f32 %v742, %v784
    %v786 = vpop.f32.mrf.mxu0
    %v787 = vadd.f32 %v744, %v786
    %v788 = vpop.f32.mrf.mxu0
    %v789 = vadd.f32 %v746, %v788
    %v790 = vpop.f32.mrf.mxu0
    %v791 = vadd.f32 %v748, %v790
    %792 = vdwg.mxu0
    %793 = vmatprep.subr.bf16.mxu0 %v594
    %794 = vmatpush1.bf16.msra.mxu0 %v593
    %795 = vmatprep.subr.bf16.mxu0 %v592
    %796 = vmatpush1.bf16.msra.mxu0 %v591
    %797 = vmatprep.subr.bf16.mxu0 %v590
    %798 = vmatpush1.bf16.msra.mxu0 %v589
    %799 = vmatprep.subr.bf16.mxu0 %v588
    %800 = vmatpush1.bf16.msra.mxu0 %v587
    %801 = vmatprep.subr.bf16.mxu0 %v586
    %802 = vmatpush1.bf16.msra.mxu0 %v585
    %803 = vmatprep.subr.bf16.mxu0 %v584
    %804 = vmatpush1.bf16.msra.mxu0 %v583
    %805 = vmatprep.subr.bf16.mxu0 %v582
    %806 = vmatpush1.bf16.msra.mxu0 %v581
    %807 = vmatprep.subr.bf16.mxu0 %v580
    %808 = vmatpush1.bf16.msra.mxu0 %v579
    %809 = vmatprep.subr.bf16.mxu0 %v610
    %810 = vmatpush2.bf16.msra.mxu0 %v609
    %811 = vmatprep.subr.bf16.mxu0 %v608
    %812 = vmatpush2.bf16.msra.mxu0 %v607
    %813 = vmatprep.subr.bf16.mxu0 %v606
    %814 = vmatpush2.bf16.msra.mxu0 %v605
    %815 = vmatprep.subr.bf16.mxu0 %v604
    %816 = vmatpush2.bf16.msra.mxu0 %v603
    %817 = vmatprep.subr.bf16.mxu0 %v602
    %818 = vmatpush2.bf16.msra.mxu0 %v601
    %819 = vmatprep.subr.bf16.mxu0 %v600
    %820 = vmatpush2.bf16.msra.mxu0 %v599
    %821 = vmatprep.subr.bf16.mxu0 %v598
    %822 = vmatpush2.bf16.msra.mxu0 %v597
    %823 = vmatprep.subr.bf16.mxu0 %v596
    %824 = vmatpush2.bf16.msra.mxu0 %v595
    %825 = vmatprep.mubr.bf16.mxu0 %v220
    %826 = vmatmul.mubr.bf16.gmra.mxu0 %v219
    %v827 = vpop.f32.mrf.mxu0
    %v828 = vadd.f32 %v785, %v827
    %v829 = vpop.f32.mrf.mxu0
    %v830 = vadd.f32 %v787, %v829
    %v831 = vpop.f32.mrf.mxu0
    %v832 = vadd.f32 %v789, %v831
    %v833 = vpop.f32.mrf.mxu0
    %v834 = vadd.f32 %v791, %v833
    %835 = vdwg.mxu0
    %v836 = vmax.f32 %v828, 0.0
    %v837 = vmax.f32 %v830, 0.0
    %v838 = vmax.f32 %v832, 0.0
    %v839 = vmax.f32 %v834, 0.0
    %v840 = vpack.c.bf16 %v838, %v836
    %v841 = vpack.c.bf16 %v839, %v837
    %v842 = vld [vmem:[#allocation7] sm:$0xff]
    %v843 = vld [vmem:[#allocation7 + $0x8] sm:$0xff]
    %v844 = vld [vmem:[#allocation7 + $0x10] sm:$0xff]
    %v845 = vld [vmem:[#allocation7 + $0x18] sm:$0xff]
    %v846 = vld [vmem:[#allocation7 + $0x20] sm:$0xff]
    %v847 = vld [vmem:[#allocation7 + $0x28] sm:$0xff]
    %v848 = vld [vmem:[#allocation7 + $0x30] sm:$0xff]
    %v849 = vld [vmem:[#allocation7 + $0x38] sm:$0xff]
    %v850 = vld [vmem:[#allocation7 + $0x40] sm:$0xff]
    %v851 = vld [vmem:[#allocation7 + $0x48] sm:$0xff]
    %v852 = vld [vmem:[#allocation7 + $0x50] sm:$0xff]
    %v853 = vld [vmem:[#allocation7 + $0x58] sm:$0xff]
    %v854 = vld [vmem:[#allocation7 + $0x60] sm:$0xff]
    %v855 = vld [vmem:[#allocation7 + $0x68] sm:$0xff]
    %v856 = vld [vmem:[#allocation7 + $0x70] sm:$0xff]
    %v857 = vld [vmem:[#allocation7 + $0x78] sm:$0xff]
    %v858 = vld [vmem:[#allocation7 + $0x80] sm:$0xff]
    %v859 = vld [vmem:[#allocation7 + $0x88] sm:$0xff]
    %v860 = vld [vmem:[#allocation7 + $0x90] sm:$0xff]
    %v861 = vld [vmem:[#allocation7 + $0x98] sm:$0xff]
    %v862 = vld [vmem:[#allocation7 + $0xa0] sm:$0xff]
    %v863 = vld [vmem:[#allocation7 + $0xa8] sm:$0xff]
    %v864 = vld [vmem:[#allocation7 + $0xb0] sm:$0xff]
    %v865 = vld [vmem:[#allocation7 + $0xb8] sm:$0xff]
    %v866 = vld [vmem:[#allocation7 + $0xc0] sm:$0xff]
    %v867 = vld [vmem:[#allocation7 + $0xc8] sm:$0xff]
    %v868 = vld [vmem:[#allocation7 + $0xd0] sm:$0xff]
    %v869 = vld [vmem:[#allocation7 + $0xd8] sm:$0xff]
    %v870 = vld [vmem:[#allocation7 + $0xe0] sm:$0xff]
    %v871 = vld [vmem:[#allocation7 + $0xe8] sm:$0xff]
    %v872 = vld [vmem:[#allocation7 + $0xf0] sm:$0xff]
    %v873 = vld [vmem:[#allocation7 + $0xf8] sm:$0xff]
    %v874 = vld [vmem:[%s4] sm:$0x3]
    %v876 = vlaneseq
    %v877 = vshrl.u32 %v876, 7
    %v878 = vsub.s32 0, %v877
    %v879 = vrot.slane %v874, %v878
    %v880 = vlaneseq
    %v881 = vshrl.u32 %v880, 7
    %v882 = vsub.s32 1, %v881
    %v883 = vrot.slane %v874, %v882
    %v918 = vunpack.c.l.b16 %v842
    %v919 = vunpack.c.h.b16 %v842
    %v920 = vunpack.c.l.b16 %v843
    %v921 = vunpack.c.h.b16 %v843
    %v922 = vunpack.c.l.b16 %v844
    %v923 = vunpack.c.h.b16 %v844
    %v924 = vunpack.c.l.b16 %v845
    %v925 = vunpack.c.h.b16 %v845
    %v926 = vunpack.c.l.b16 %v846
    %v927 = vunpack.c.h.b16 %v846
    %v928 = vunpack.c.l.b16 %v847
    %v929 = vunpack.c.h.b16 %v847
    %v930 = vunpack.c.l.b16 %v848
    %v931 = vunpack.c.h.b16 %v848
    %v932 = vunpack.c.l.b16 %v849
    %v933 = vunpack.c.h.b16 %v849
    %v934 = vunpack.c.l.b16 %v850
    %v935 = vunpack.c.h.b16 %v850
    %v936 = vunpack.c.l.b16 %v851
    %v937 = vunpack.c.h.b16 %v851
    %v938 = vunpack.c.l.b16 %v852
    %v939 = vunpack.c.h.b16 %v852
    %v940 = vunpack.c.l.b16 %v853
    %v941 = vunpack.c.h.b16 %v853
    %v942 = vunpack.c.l.b16 %v854
    %v943 = vunpack.c.h.b16 %v854
    %v944 = vunpack.c.l.b16 %v855
    %v945 = vunpack.c.h.b16 %v855
    %v946 = vunpack.c.l.b16 %v856
    %v947 = vunpack.c.h.b16 %v856
    %v948 = vunpack.c.l.b16 %v857
    %v949 = vunpack.c.h.b16 %v857
    %v950 = vunpack.c.l.b16 %v858
    %v951 = vunpack.c.h.b16 %v858
    %v952 = vunpack.c.l.b16 %v859
    %v953 = vunpack.c.h.b16 %v859
    %v954 = vunpack.c.l.b16 %v860
    %v955 = vunpack.c.h.b16 %v860
    %v956 = vunpack.c.l.b16 %v861
    %v957 = vunpack.c.h.b16 %v861
    %v958 = vunpack.c.l.b16 %v862
    %v959 = vunpack.c.h.b16 %v862
    %v960 = vunpack.c.l.b16 %v863
    %v961 = vunpack.c.h.b16 %v863
    %v962 = vunpack.c.l.b16 %v864
    %v963 = vunpack.c.h.b16 %v864
    %v964 = vunpack.c.l.b16 %v865
    %v965 = vunpack.c.h.b16 %v865
    %v966 = vunpack.c.l.b16 %v866
    %v967 = vunpack.c.h.b16 %v866
    %v968 = vunpack.c.l.b16 %v867
    %v969 = vunpack.c.h.b16 %v867
    %v970 = vunpack.c.l.b16 %v868
    %v971 = vunpack.c.h.b16 %v868
    %v972 = vunpack.c.l.b16 %v869
    %v973 = vunpack.c.h.b16 %v869
    %v974 = vunpack.c.l.b16 %v870
    %v975 = vunpack.c.h.b16 %v870
    %v976 = vunpack.c.l.b16 %v871
    %v977 = vunpack.c.h.b16 %v871
    %v978 = vunpack.c.l.b16 %v872
    %v979 = vunpack.c.h.b16 %v872
    %v980 = vunpack.c.l.b16 %v873
    %v981 = vunpack.c.h.b16 %v873
    %v982 = vpack.c.b16 %v920, %v918
    %v983 = vpack.c.b16 %v921, %v919
    %v984 = vpack.c.b16 %v924, %v922
    %v985 = vpack.c.b16 %v925, %v923
    %v986 = vpack.c.b16 %v928, %v926
    %v987 = vpack.c.b16 %v929, %v927
    %v988 = vpack.c.b16 %v932, %v930
    %v989 = vpack.c.b16 %v933, %v931
    %v990 = vpack.c.b16 %v936, %v934
    %v991 = vpack.c.b16 %v937, %v935
    %v992 = vpack.c.b16 %v940, %v938
    %v993 = vpack.c.b16 %v941, %v939
    %v994 = vpack.c.b16 %v944, %v942
    %v995 = vpack.c.b16 %v945, %v943
    %v996 = vpack.c.b16 %v948, %v946
    %v997 = vpack.c.b16 %v949, %v947
    %v998 = vpack.c.b16 %v952, %v950
    %v999 = vpack.c.b16 %v953, %v951
    %v1000 = vpack.c.b16 %v956, %v954
    %v1001 = vpack.c.b16 %v957, %v955
    %v1002 = vpack.c.b16 %v960, %v958
    %v1003 = vpack.c.b16 %v961, %v959
    %v1004 = vpack.c.b16 %v964, %v962
    %v1005 = vpack.c.b16 %v965, %v963
    %v1006 = vpack.c.b16 %v968, %v966
    %v1007 = vpack.c.b16 %v969, %v967
    %v1008 = vpack.c.b16 %v972, %v970
    %v1009 = vpack.c.b16 %v973, %v971
    %v1010 = vpack.c.b16 %v976, %v974
    %v1011 = vpack.c.b16 %v977, %v975
    %v1012 = vpack.c.b16 %v980, %v978
    %v1013 = vpack.c.b16 %v981, %v979
    %1046 = vmatprep.subr.bf16.mxu0 %v997
    %1047 = vmatpush1.bf16.msra.mxu0 %v996
    %1048 = vmatprep.subr.bf16.mxu0 %v995
    %1049 = vmatpush1.bf16.msra.mxu0 %v994
    %1050 = vmatprep.subr.bf16.mxu0 %v993
    %1051 = vmatpush1.bf16.msra.mxu0 %v992
    %1052 = vmatprep.subr.bf16.mxu0 %v991
    %1053 = vmatpush1.bf16.msra.mxu0 %v990
    %1054 = vmatprep.subr.bf16.mxu0 %v989
    %1055 = vmatpush1.bf16.msra.mxu0 %v988
    %1056 = vmatprep.subr.bf16.mxu0 %v987
    %1057 = vmatpush1.bf16.msra.mxu0 %v986
    %1058 = vmatprep.subr.bf16.mxu0 %v985
    %1059 = vmatpush1.bf16.msra.mxu0 %v984
    %1060 = vmatprep.subr.bf16.mxu0 %v983
    %1061 = vmatpush1.bf16.msra.mxu0 %v982
    %1062 = vmatprep.subr.bf16.mxu0 %v1013
    %1063 = vmatpush2.bf16.msra.mxu0 %v1012
    %1064 = vmatprep.subr.bf16.mxu0 %v1011
    %1065 = vmatpush2.bf16.msra.mxu0 %v1010
    %1066 = vmatprep.subr.bf16.mxu0 %v1009
    %1067 = vmatpush2.bf16.msra.mxu0 %v1008
    %1068 = vmatprep.subr.bf16.mxu0 %v1007
    %1069 = vmatpush2.bf16.msra.mxu0 %v1006
    %1070 = vmatprep.subr.bf16.mxu0 %v1005
    %1071 = vmatpush2.bf16.msra.mxu0 %v1004
    %1072 = vmatprep.subr.bf16.mxu0 %v1003
    %1073 = vmatpush2.bf16.msra.mxu0 %v1002
    %1074 = vmatprep.subr.bf16.mxu0 %v1001
    %1075 = vmatpush2.bf16.msra.mxu0 %v1000
    %1076 = vmatprep.subr.bf16.mxu0 %v999
    %1077 = vmatpush2.bf16.msra.mxu0 %v998
    %1078 = vmatprep.mubr.bf16.mxu0 %v841
    %1079 = vmatmul.mubr.bf16.gmra.mxu0 %v840
    %v1080 = vpop.f32.mrf.mxu0
    %v1081 = vadd.f32 %v879, %v1080
    %v1082 = vpop.f32.mrf.mxu0
    %v1083 = vadd.f32 %v883, %v1082
    %v1084 = vpop.f32.mrf.mxu0
    %v1085 = vadd.f32 %v879, %v1084
    %v1086 = vpop.f32.mrf.mxu0
    %v1087 = vadd.f32 %v883, %v1086
    %1088 = vdwg.mxu0
    %v1089 = vmax.f32 %v1081, 0.0
    %v1090 = vmax.f32 %v1083, 0.0
    %v1091 = vmax.f32 %v1085, 0.0
    %v1092 = vmax.f32 %v1087, 0.0
    %v1093 = vpack.c.bf16 %v1091, %v1089
    %v1094 = vpack.c.bf16 %v1092, %v1090
    %v1095 = vld [vmem:[#allocation8] sm:$0xf]
    %v1096 = vld [vmem:[#allocation8 + $0x4] sm:$0xf]
    %v1097 = vld [vmem:[#allocation8 + $0x8] sm:$0xf]
    %v1098 = vld [vmem:[#allocation8 + $0xc] sm:$0xf]
    %v1099 = vld [vmem:[#allocation8 + $0x10] sm:$0xf]
    %v1100 = vld [vmem:[#allocation8 + $0x14] sm:$0xf]
    %v1101 = vld [vmem:[#allocation8 + $0x18] sm:$0xf]
    %v1102 = vld [vmem:[#allocation8 + $0x1c] sm:$0xf]
    %v1103 = vld [vmem:[#allocation8 + $0x20] sm:$0xf]
    %v1104 = vld [vmem:[#allocation8 + $0x24] sm:$0xf]
    %v1105 = vld [vmem:[#allocation8 + $0x28] sm:$0xf]
    %v1106 = vld [vmem:[#allocation8 + $0x2c] sm:$0xf]
    %v1107 = vld [vmem:[#allocation8 + $0x30] sm:$0xf]
    %v1108 = vld [vmem:[#allocation8 + $0x34] sm:$0xf]
    %v1109 = vld [vmem:[#allocation8 + $0x38] sm:$0xf]
    %v1110 = vld [vmem:[#allocation8 + $0x3c] sm:$0xf]
    %v1111 = vld [vmem:[#allocation8 + $0x40] sm:$0xf]
    %v1112 = vld [vmem:[#allocation8 + $0x44] sm:$0xf]
    %v1113 = vld [vmem:[#allocation8 + $0x48] sm:$0xf]
    %v1114 = vld [vmem:[#allocation8 + $0x4c] sm:$0xf]
    %v1115 = vld [vmem:[#allocation8 + $0x50] sm:$0xf]
    %v1116 = vld [vmem:[#allocation8 + $0x54] sm:$0xf]
    %v1117 = vld [vmem:[#allocation8 + $0x58] sm:$0xf]
    %v1118 = vld [vmem:[#allocation8 + $0x5c] sm:$0xf]
    %v1119 = vld [vmem:[#allocation8 + $0x60] sm:$0xf]
    %v1120 = vld [vmem:[#allocation8 + $0x64] sm:$0xf]
    %v1121 = vld [vmem:[#allocation8 + $0x68] sm:$0xf]
    %v1122 = vld [vmem:[#allocation8 + $0x6c] sm:$0xf]
    %v1123 = vld [vmem:[#allocation8 + $0x70] sm:$0xf]
    %v1124 = vld [vmem:[#allocation8 + $0x74] sm:$0xf]
    %v1125 = vld [vmem:[#allocation8 + $0x78] sm:$0xf]
    %v1126 = vld [vmem:[#allocation8 + $0x7c] sm:$0xf]
    %v1127 = vld [vmem:[%s6] sm:$0x1]
    %v1129 = vlaneseq
    %v1130 = vshrl.u32 %v1129, 7
    %v1131 = vsub.s32 0, %v1130
    %v1132 = vrot.slane %v1127, %v1131
    %v1166 = vunpack.c.l.b16 %v1095
    %v1167 = vunpack.c.l.b16 %v1096
    %v1168 = vunpack.c.l.b16 %v1097
    %v1169 = vunpack.c.l.b16 %v1098
    %v1170 = vunpack.c.l.b16 %v1099
    %v1171 = vunpack.c.l.b16 %v1100
    %v1172 = vunpack.c.l.b16 %v1101
    %v1173 = vunpack.c.l.b16 %v1102
    %v1174 = vunpack.c.l.b16 %v1103
    %v1175 = vunpack.c.l.b16 %v1104
    %v1176 = vunpack.c.l.b16 %v1105
    %v1177 = vunpack.c.l.b16 %v1106
    %v1178 = vunpack.c.l.b16 %v1107
    %v1179 = vunpack.c.l.b16 %v1108
    %v1180 = vunpack.c.l.b16 %v1109
    %v1181 = vunpack.c.l.b16 %v1110
    %v1182 = vunpack.c.l.b16 %v1111
    %v1183 = vunpack.c.l.b16 %v1112
    %v1184 = vunpack.c.l.b16 %v1113
    %v1185 = vunpack.c.l.b16 %v1114
    %v1186 = vunpack.c.l.b16 %v1115
    %v1187 = vunpack.c.l.b16 %v1116
    %v1188 = vunpack.c.l.b16 %v1117
    %v1189 = vunpack.c.l.b16 %v1118
    %v1190 = vunpack.c.l.b16 %v1119
    %v1191 = vunpack.c.l.b16 %v1120
    %v1192 = vunpack.c.l.b16 %v1121
    %v1193 = vunpack.c.l.b16 %v1122
    %v1194 = vunpack.c.l.b16 %v1123
    %v1195 = vunpack.c.l.b16 %v1124
    %v1196 = vunpack.c.l.b16 %v1125
    %v1197 = vunpack.c.l.b16 %v1126
    %v1198 = vpack.c.b16 %v1167, %v1166
    %v1199 = vpack.c.b16 %v1169, %v1168
    %v1200 = vpack.c.b16 %v1171, %v1170
    %v1201 = vpack.c.b16 %v1173, %v1172
    %v1202 = vpack.c.b16 %v1175, %v1174
    %v1203 = vpack.c.b16 %v1177, %v1176
    %v1204 = vpack.c.b16 %v1179, %v1178
    %v1205 = vpack.c.b16 %v1181, %v1180
    %v1206 = vpack.c.b16 %v1183, %v1182
    %v1207 = vpack.c.b16 %v1185, %v1184
    %v1208 = vpack.c.b16 %v1187, %v1186
    %v1209 = vpack.c.b16 %v1189, %v1188
    %v1210 = vpack.c.b16 %v1191, %v1190
    %v1211 = vpack.c.b16 %v1193, %v1192
    %v1212 = vpack.c.b16 %v1195, %v1194
    %v1213 = vpack.c.b16 %v1197, %v1196
    %1230 = vmatprep.subr.bf16.mxu0 0
    %1231 = vmatpush1.bf16.msra.mxu0 %v1205
    %1232 = vmatprep.subr.bf16.mxu0 0
    %1233 = vmatpush1.bf16.msra.mxu0 %v1204
    %1234 = vmatprep.subr.bf16.mxu0 0
    %1235 = vmatpush1.bf16.msra.mxu0 %v1203
    %1236 = vmatprep.subr.bf16.mxu0 0
    %1237 = vmatpush1.bf16.msra.mxu0 %v1202
    %1238 = vmatprep.subr.bf16.mxu0 0
    %1239 = vmatpush1.bf16.msra.mxu0 %v1201
    %1240 = vmatprep.subr.bf16.mxu0 0
    %1241 = vmatpush1.bf16.msra.mxu0 %v1200
    %1242 = vmatprep.subr.bf16.mxu0 0
    %1243 = vmatpush1.bf16.msra.mxu0 %v1199
    %1244 = vmatprep.subr.bf16.mxu0 0
    %1245 = vmatpush1.bf16.msra.mxu0 %v1198
    %1246 = vmatprep.subr.bf16.mxu0 0
    %1247 = vmatpush2.bf16.msra.mxu0 %v1213
    %1248 = vmatprep.subr.bf16.mxu0 0
    %1249 = vmatpush2.bf16.msra.mxu0 %v1212
    %1250 = vmatprep.subr.bf16.mxu0 0
    %1251 = vmatpush2.bf16.msra.mxu0 %v1211
    %1252 = vmatprep.subr.bf16.mxu0 0
    %1253 = vmatpush2.bf16.msra.mxu0 %v1210
    %1254 = vmatprep.subr.bf16.mxu0 0
    %1255 = vmatpush2.bf16.msra.mxu0 %v1209
    %1256 = vmatprep.subr.bf16.mxu0 0
    %1257 = vmatpush2.bf16.msra.mxu0 %v1208
    %1258 = vmatprep.subr.bf16.mxu0 0
    %1259 = vmatpush2.bf16.msra.mxu0 %v1207
    %1260 = vmatprep.subr.bf16.mxu0 0
    %1261 = vmatpush2.bf16.msra.mxu0 %v1206
    %1262 = vmatprep.mubr.bf16.mxu0 %v1094
    %1263 = vmatmul.mubr.bf16.gmra.mxu0 %v1093
    %v1264 = vpop.f32.mrf.mxu0
    %v1265 = vadd.f32 %v1132, %v1264
    %v1266 = vpop.f32.mrf.mxu0
    %v1267 = vpop.f32.mrf.mxu0
    %v1268 = vadd.f32 %v1132, %v1267
    %v1269 = vpop.f32.mrf.mxu0
    %1270 = vdwg.mxu0
    %v1271 = vpack.c.bf16 %v1268, %v1265
    %v1273 = vunpack.c.l.b16 %v1271
    %v1274 = vunpack.c.h.b16 %v1271
    %v1275 = vpack.c.b16 %v1273, %v1273
    %v1276 = vpack.c.b16 %v1274, %v1274
    %1279 = vst [vmem:[#allocation10] sm:$0xf] %v1275
    %1280 = vst [vmem:[#allocation10 + $0x4] sm:$0xf] %v1276
    // Predicated region
    $region46: #{_qnet_pallas.1} parent=1 // pred_check
      _
    $region47: #{_qnet_pallas.1} parent=1 // pred_check_branch
      %1282 = sbr.rel (0) target = $region49
    $region48: #{_qnet_pallas.1} parent=1 // pred_region
      %s1284 = ssub.s32 128, 128
      %1285 = vsyncadd [#allocation4], %s1284
      %s1286 = sshll.u32 [#allocation10], 4
      %s1287 = int_to_ptr.vmem [resolvable:$true] %s1286
      %1292 = dma.vmem_to_hbm [thread:$0]  %s1287, 128, %s7, [#allocation4], 64, 64, 4
    $region49: #{_qnet_pallas.1} parent=1 // pred_fallthru
      _
    // Predicated region
    $region50: #{_qnet_pallas.1} parent=1 // pred_check
      _
    $region51: #{_qnet_pallas.1} parent=1 // pred_check_branch
      %1294 = sbr.rel (0) target = $region53
    $region52: #{_qnet_pallas.1} parent=1 // pred_region
      %1295 = dma.done [#allocation4], 128
    $region53: #{_qnet_pallas.1} parent=1 // pred_fallthru
      _
    %1296 = vsyncpa [#allocation3], 1
    %1297 = vsyncpa [#allocation6], 1
    %1298 = vsyncpa [#allocation9], 1
    %1299 = vsyncpa [#allocation4], 1

</llo_original>
